<compile_context>
chip_gen: v7x
topology: tpu7x:2x2x1
jax: 0.10.0
libtpu: 0.0.40
codegen_flags: <defaults>
</compile_context>

<pallas_src>
import math
import jax
import jax.numpy as jnp
from jax.experimental import pallas as pl
from jax.experimental.pallas import tpu as pltpu

_LANE = 128
_SUBLANE = 8


def _round_up(x, m):
    return ((x + m - 1) // m) * m


def _logreg_kernel(x_ref, wt_ref, b_ref, o_ref):
    # x_ref : [TILE_N, ft_in]   (VMEM, compute dtype, pipelined per grid step)
    # wt_ref: [ft_in, NC_PAD]   (VMEM, compute dtype, resident across grid)
    # b_ref : [1, NC_PAD]       (VMEM, f32, resident)
    # o_ref : [TILE_N, NC_PAD]  (VMEM, f32, lane-dense stores)
    acc = jnp.dot(x_ref[...], wt_ref[...], preferred_element_type=jnp.float32)
    o_ref[...] = (acc + b_ref[...]).astype(o_ref.dtype)


def prepare_logreg_params(weight, bias, compute_dtype=jnp.float32):
    """One-time parameter prep (do at init, NOT per forward).

    weight: [nb_classes, ft_in] (PyTorch layout), bias: [nb_classes].
    Returns wt_padded [ft_in, NC_PAD] in `compute_dtype` and bias_padded
    [1, NC_PAD] in f32, with NC_PAD a multiple of 128 lanes.
    """
    nb_classes, ft_in = weight.shape
    nc_pad = _round_up(max(nb_classes, _LANE), _LANE)
    wt = jnp.zeros((ft_in, nc_pad), dtype=compute_dtype)
    wt = wt.at[:, :nb_classes].set(weight.T.astype(compute_dtype))
    b2 = jnp.zeros((1, nc_pad), dtype=jnp.float32)
    b2 = b2.at[:, :nb_classes].set(bias.astype(jnp.float32)[None, :])
    return wt, b2


def logreg_forward(x, wt_padded, bias_padded, nb_classes, *, tile_n=512):
    """x: [N, ft_in]; wt_padded: [ft_in, NC_PAD]; bias_padded: [1, NC_PAD]."""
    N, ft_in = x.shape
    ft_in_w, nc_pad = wt_padded.shape
    assert ft_in == ft_in_w
    compute_dtype = wt_padded.dtype
    x = x.astype(compute_dtype)

    # Row tile: multiple of the 8-row sublane; shrink for tiny batches so the
    # block is not grossly larger than the array.
    tile_n = min(tile_n, _round_up(N, _SUBLANE))
    tile_n = _round_up(tile_n, _SUBLANE)
    grid_n = pl.cdiv(N, tile_n)

    itemsize = jnp.dtype(compute_dtype).itemsize
    vmem_bytes = (2 * tile_n * ft_in * itemsize       # double-buffered x tile
                  + 2 * tile_n * nc_pad * 4           # double-buffered out tile
                  + ft_in * nc_pad * itemsize         # resident transposed weight
                  + nc_pad * 4                        # resident bias row
                  + (4 << 20))                        # slack
    vmem_bytes = int(min(vmem_bytes, 100 << 20))

    out = pl.pallas_call(
        _logreg_kernel,
        out_shape=jax.ShapeDtypeStruct((N, nc_pad), jnp.float32),
        grid_spec=pltpu.PrefetchScalarGridSpec(
            num_scalar_prefetch=0,
            grid=(grid_n,),
            in_specs=[
                pl.BlockSpec((tile_n, ft_in), lambda i: (i, 0)),
                pl.BlockSpec((ft_in, nc_pad), lambda i: (0, 0)),
                pl.BlockSpec((1, nc_pad), lambda i: (0, 0)),
            ],
            out_specs=pl.BlockSpec((tile_n, nc_pad), lambda i: (i, 0)),
        ),
        compiler_params=pltpu.CompilerParams(
            dimension_semantics=("parallel",),
            vmem_limit_bytes=vmem_bytes),
    )(x, wt_padded, bias_padded)

    return out[:, :nb_classes]


def init_logreg_params(key, ft_in, nb_classes, dtype=jnp.float32):
    # xavier_uniform_ on weight [nb_classes, ft_in]; bias zeros (weights_init)
    limit = math.sqrt(6.0 / (ft_in + nb_classes))
    w = jax.random.uniform(key, (nb_classes, ft_in), dtype=dtype,
                           minval=-limit, maxval=limit)
    b = jnp.zeros((nb_classes,), dtype=dtype)
    return w, b


if __name__ == "__main__":
    # Small shapes: batch of 8 node embeddings, hidden dim 32, 8 classes.
    N, FT_IN, NB_CLASSES = 8, 32, 8

    key = jax.random.PRNGKey(0)
    k_x, k_w = jax.random.split(key)
    x = jax.random.normal(k_x, (N, FT_IN), dtype=jnp.float32)
    weight, bias = init_logreg_params(k_w, FT_IN, NB_CLASSES)

    # Plain-JAX reference of the PyTorch forward.
    ref = x @ weight.T + bias

    # f32 compute path (bit-accurate enough for tight tolerance).
    wt32, b32 = prepare_logreg_params(weight, bias, compute_dtype=jnp.float32)
    out32 = jax.block_until_ready(logreg_forward(x, wt32, b32, NB_CLASSES))
    assert out32.shape == (N, NB_CLASSES)
    assert jnp.allclose(out32, ref, atol=1e-5, rtol=1e-5)

    # bf16 activation/weight path (halves HBM bytes on v6e/v7x; f32 accumulate
    # + f32 bias add inside the kernel).
    wt16, b16 = prepare_logreg_params(weight, bias, compute_dtype=jnp.bfloat16)
    out16 = jax.block_until_ready(logreg_forward(x, wt16, b16, NB_CLASSES))
    assert out16.shape == (N, NB_CLASSES)
    assert jnp.allclose(out16, ref, atol=5e-2, rtol=5e-2)

    print("KERNEL_OK")
</pallas_src>

<mosaic_0001>
module attributes {stable_mosaic.version = 11 : i64} {
  func.func @_logreg_kernel(%arg0: i32, %arg1: memref<8x32xf32, #tpu.memory_space<vmem>>, %arg2: memref<32x128xf32, #tpu.memory_space<vmem>>, %arg3: memref<1x128xf32, #tpu.memory_space<vmem>>, %arg4: memref<8x128xf32, #tpu.memory_space<vmem>>) attributes {dimension_semantics = [#tpu.dimension_semantics<parallel>], iteration_bounds = array<i64: 1>, scalar_prefetch = 0 : i64, scratch_operands = 0 : i64, tpu.core_type = #tpu.core_type<tc>, window_params = [{transform_indices = @transform_0, window_bounds = array<i64: 8, 32>}, {pipeline_mode = #tpu.pipeline_mode<synchronous>, transform_indices = @transform_1, window_bounds = array<i64: 32, 128>}, {pipeline_mode = #tpu.pipeline_mode<synchronous>, transform_indices = @transform_2, window_bounds = array<i64: 1, 128>}, {transform_indices = @transform_3, window_bounds = array<i64: 8, 128>}]} {
    %c0 = arith.constant 0 : index
    %c0_0 = arith.constant 0 : index
    %0 = vector.load %arg1[%c0, %c0_0] : memref<8x32xf32, #tpu.memory_space<vmem>>, vector<8x32xf32>
    %c0_1 = arith.constant 0 : index
    %c0_2 = arith.constant 0 : index
    %1 = vector.load %arg2[%c0_1, %c0_2] : memref<32x128xf32, #tpu.memory_space<vmem>>, vector<32x128xf32>
    %cst = arith.constant dense<0.000000e+00> : vector<8x128xf32>
    %2 = tpu.matmul %0, %1, %cst {dimension_numbers = #tpu.dot_dimension_numbers<[1], [0], [0], [1], [0, 0, 1, 1], [], []>} : vector<8x32xf32>, vector<32x128xf32>, vector<8x128xf32> -> vector<8x128xf32>
    %c0_3 = arith.constant 0 : index
    %c0_4 = arith.constant 0 : index
    %3 = vector.load %arg3[%c0_3, %c0_4] : memref<1x128xf32, #tpu.memory_space<vmem>>, vector<1x128xf32>
    %4 = vector.broadcast %3 : vector<1x128xf32> to vector<8x128xf32>
    %5 = arith.addf %2, %4 : vector<8x128xf32>
    %c0_5 = arith.constant 0 : index
    %c0_6 = arith.constant 0 : index
    %6 = vector.load %arg4[%c0_5, %c0_6] : memref<8x128xf32, #tpu.memory_space<vmem>>, vector<8x128xf32>
    tpu.vector_store %arg4[%c0_5, %c0_6], %5 {strides = array<i32>} : memref<8x128xf32, #tpu.memory_space<vmem>>, vector<8x128xf32>,
    return
  }
  func.func @transform_0(%arg0: i32) -> (i32, i32) {
    %c0_i32 = arith.constant 0 : i32
    %c0_i32_0 = arith.constant 0 : i32
    return %arg0, %c0_i32 : i32, i32
  }
  func.func @transform_1(%arg0: i32) -> (i32, i32) {
    %c0_i32 = arith.constant 0 : i32
    %c0_i32_0 = arith.constant 0 : i32
    %c0_i32_1 = arith.constant 0 : i32
    return %c0_i32, %c0_i32_0 : i32, i32
  }
  func.func @transform_2(%arg0: i32) -> (i32, i32) {
    %c0_i32 = arith.constant 0 : i32
    %c0_i32_0 = arith.constant 0 : i32
    %c0_i32_1 = arith.constant 0 : i32
    return %c0_i32, %c0_i32_0 : i32, i32
  }
  func.func @transform_3(%arg0: i32) -> (i32, i32) {
    %c0_i32 = arith.constant 0 : i32
    %c0_i32_0 = arith.constant 0 : i32
    return %arg0, %c0_i32 : i32, i32
  }
}

</mosaic_0001>

<llo_original>
// kernel: tpu_custom_call.1
$region0: #{tpu_custom_call.1}
  #allocation0 [shape = 'u32[]', space=smem, size = 0x4, offset = 0x4, fixed_abs, tag = 'smem constant byte address 0x4 - core index']
  #allocation1 [shape = 'u32[144,128]{1,0:T(1,128)}', space=vmem, size = 0x12000, scoped, tag = 'internal scratch']
  %s0 = inlined_call_operand.hbm [shape: f32[8,32], index: 0, kind: input, shape index: {}]
  %s1 = inlined_call_operand.hbm [shape: f32[32,128], index: 1, kind: input, shape index: {}]
  %s2 = inlined_call_operand.vmem [shape: f32[1,128], index: 2, kind: input, shape index: {}]
  %s3 = inlined_call_operand.hbm [shape: f32[8,128], index: 3, kind: output, shape index: {}]
  %s4 = sld [smem:[#allocation0]]
  $region30: #{tpu_custom_call.1} parent=0
    _
  %s6 = ssub.s32 1, %s4
  %s7 = scalar_select 0, %s6, %s4
  $region1: #{tpu_custom_call.1} parent=0
    #allocation2 [shape = 'u8[4096]{0}', space=vmem, size = 0x1000, scoped, tag = 'input window, operand 0, single buffered']
    #allocation3 [shape = 's32[1]{0}', space=sflag, size = 0x4, scoped, tag = 'scoped memory for tpu_custom_call.1']
    #allocation4 [shape = 's32[1]{0}', space=sflag, size = 0x4, scoped, tag = 'scoped memory for tpu_custom_call.1']
    #allocation5 [shape = 'u8[16384]{0}', space=vmem, size = 0x4000, scoped, tag = 'input window, operand 1, single buffered']
    #allocation6 [shape = 's32[1]{0}', space=sflag, size = 0x4, scoped, tag = 'scoped memory for tpu_custom_call.1']
    #allocation7 [shape = 'u8[4096]{0}', space=vmem, size = 0x1000, scoped, tag = 'output window, operand 0, single buffered']
    %8 = vsyncpa [#allocation3], 0
    %9 = vsyncpa [#allocation6], 0
    %10 = vsyncpa [#allocation4], 0
    // Predicated region
    $region2: #{tpu_custom_call.1} parent=1 // pred_check
      _
    $region3: #{tpu_custom_call.1} parent=1 // pred_check_branch
      %12 = sbr.rel (0) target = $region5
    $region4: #{tpu_custom_call.1} parent=1 // pred_region
      %s14 = ssub.s32 128, 128
      %15 = vsyncadd [#allocation3], %s14
      %s17 = sshll.u32 [#allocation2], 4
      %s18 = int_to_ptr.vmem [resolvable:$true] %s17
      %20 = dma.hbm_to_vmem [thread:$0]  %s0, 128, %s18, [#allocation3]
    $region5: #{tpu_custom_call.1} parent=1 // pred_fallthru
      _
    // Predicated region
    $region6: #{tpu_custom_call.1} parent=1 // pred_check
      _
    $region7: #{tpu_custom_call.1} parent=1 // pred_check_branch
      %22 = sbr.rel (0) target = $region9
    $region8: #{tpu_custom_call.1} parent=1 // pred_region
      %s24 = ssub.s32 512, 512
      %25 = vsyncadd [#allocation6], %s24
      %s26 = sshll.u32 [#allocation5], 4
      %s27 = int_to_ptr.vmem [resolvable:$true] %s26
      %32 = dma.hbm_to_vmem [thread:$0]  %s1, 512, %s27, [#allocation6], 128, 128, 8
    $region9: #{tpu_custom_call.1} parent=1 // pred_fallthru
      _
    // Predicated region
    $region10: #{tpu_custom_call.1} parent=1 // pred_check
      _
    $region11: #{tpu_custom_call.1} parent=1 // pred_check_branch
      %34 = sbr.rel (0) target = $region13
    $region12: #{tpu_custom_call.1} parent=1 // pred_region
      _
    $region13: #{tpu_custom_call.1} parent=1 // pred_fallthru
      _
    // Predicated region
    $region14: #{tpu_custom_call.1} parent=1 // pred_check
      _
    $region15: #{tpu_custom_call.1} parent=1 // pred_check_branch
      %36 = sbr.rel (0) target = $region17
    $region16: #{tpu_custom_call.1} parent=1 // pred_region
      %37 = dma.done [#allocation3], 128
    $region17: #{tpu_custom_call.1} parent=1 // pred_fallthru
      _
    // Predicated region
    $region18: #{tpu_custom_call.1} parent=1 // pred_check
      _
    $region19: #{tpu_custom_call.1} parent=1 // pred_check_branch
      %39 = sbr.rel (0) target = $region21
    $region20: #{tpu_custom_call.1} parent=1 // pred_region
      %40 = dma.done [#allocation6], 512
    $region21: #{tpu_custom_call.1} parent=1 // pred_fallthru
      _
    %v41 = vld [vmem:[#allocation2] sm:$0xff]
    %v42 = vld [vmem:[#allocation5] sm:$0xff]
    %v43 = vld [vmem:[#allocation5 + $0x8] sm:$0xff]
    %v44 = vld [vmem:[#allocation5 + $0x10] sm:$0xff]
    %v45 = vld [vmem:[#allocation5 + $0x18] sm:$0xff]
    %v46 = vld [vmem:[%s2] sm:$0x1]
    %v48 = vlaneseq
    %v49 = vshrl.u32 %v48, 7
    %v50 = vsub.s32 0, %v49
    %v51 = vrot.slane %v46, %v50
    %vm53 = vcmask 261120
    %v55 = vsel %vm53, %v41, 0
    %57 = vmatprep.subr.mxu0 0.0
    %58 = vmatpush1.msra.mxu0 %v42
    %59 = vmatprep.subr.mxu0 0.0
    %60 = vmatpush1.msra.mxu0 %v43
    %61 = vmatprep.subr.mxu0 0.0
    %62 = vmatpush1.msra.mxu0 %v44
    %63 = vmatprep.subr.mxu0 0.0
    %64 = vmatpush1.msra.mxu0 %v45
    %65 = vmatprep.subr.mxu0 0.0
    %66 = vmatpush1.msra.mxu0 0.0
    %67 = vmatprep.subr.mxu0 0.0
    %68 = vmatpush1.msra.mxu0 0.0
    %69 = vmatprep.subr.mxu0 0.0
    %70 = vmatpush1.msra.mxu0 0.0
    %71 = vmatprep.subr.mxu0 0.0
    %72 = vmatpush1.msra.mxu0 0.0
    %73 = vmatprep.subr.mxu0 0.0
    %74 = vmatpush1.msra.mxu0 0.0
    %75 = vmatprep.subr.mxu0 0.0
    %76 = vmatpush1.msra.mxu0 0.0
    %77 = vmatprep.subr.mxu0 0.0
    %78 = vmatpush1.msra.mxu0 0.0
    %79 = vmatprep.subr.mxu0 0.0
    %80 = vmatpush1.msra.mxu0 0.0
    %81 = vmatprep.subr.mxu0 0.0
    %82 = vmatpush1.msra.mxu0 0.0
    %83 = vmatprep.subr.mxu0 0.0
    %84 = vmatpush1.msra.mxu0 0.0
    %85 = vmatprep.subr.mxu0 0.0
    %86 = vmatpush1.msra.mxu0 0.0
    %87 = vmatprep.subr.mxu0 0.0
    %88 = vmatpush1.msra.mxu0 0.0
    %89 = vmatprep.subr.mxu0 0.0
    %90 = vmatpush1.msra.mxu0 0.0
    %91 = vmatprep.subr.mxu0 0.0
    %92 = vmatpush1.msra.mxu0 0.0
    %93 = vmatprep.subr.mxu0 0.0
    %94 = vmatpush1.msra.mxu0 0.0
    %95 = vmatprep.subr.mxu0 0.0
    %96 = vmatpush1.msra.mxu0 0.0
    %97 = vmatprep.subr.mxu0 0.0
    %98 = vmatpush1.msra.mxu0 0.0
    %99 = vmatprep.subr.mxu0 0.0
    %100 = vmatpush1.msra.mxu0 0.0
    %101 = vmatprep.subr.mxu0 0.0
    %102 = vmatpush1.msra.mxu0 0.0
    %103 = vmatprep.subr.mxu0 0.0
    %104 = vmatpush1.msra.mxu0 0.0
    %105 = vmatprep.subr.mxu0 0.0
    %106 = vmatpush1.msra.mxu0 0.0
    %107 = vmatprep.subr.mxu0 0.0
    %108 = vmatpush1.msra.mxu0 0.0
    %109 = vmatprep.subr.mxu0 0.0
    %110 = vmatpush1.msra.mxu0 0.0
    %111 = vmatprep.subr.mxu0 0.0
    %112 = vmatpush1.msra.mxu0 0.0
    %113 = vmatprep.subr.mxu0 0.0
    %114 = vmatpush1.msra.mxu0 0.0
    %115 = vmatprep.subr.mxu0 0.0
    %116 = vmatpush1.msra.mxu0 0.0
    %117 = vmatprep.subr.mxu0 0.0
    %118 = vmatpush1.msra.mxu0 0.0
    %119 = vmatprep.subr.mxu0 0.0
    %120 = vmatpush1.msra.mxu0 0.0
    %121 = vmatprep.mubr.f32.mxu0 0.0
    %122 = vmatmul.mubr.f32.gmra.mrb[0].mxu0 %v55
    %v123 = vpop.f32.mrb[0].mxu0
    %v124 = vadd.f32 %v51, %v123
    %v125 = vpop.f32.mrb[0].mxu0
    %126 = vdwg.mxu0
    %127 = vst [vmem:[#allocation7] sm:$0xff] %v124
    // Predicated region
    $region22: #{tpu_custom_call.1} parent=1 // pred_check
      _
    $region23: #{tpu_custom_call.1} parent=1 // pred_check_branch
      %129 = sbr.rel (0) target = $region25
    $region24: #{tpu_custom_call.1} parent=1 // pred_region
      %s131 = ssub.s32 128, 128
      %132 = vsyncadd [#allocation4], %s131
      %s134 = sshll.u32 [#allocation7], 4
      %s135 = int_to_ptr.vmem [resolvable:$true] %s134
      %137 = dma.vmem_to_hbm [thread:$0]  %s135, 128, %s3, [#allocation4]
    $region25: #{tpu_custom_call.1} parent=1 // pred_fallthru
      _
    // Predicated region
    $region26: #{tpu_custom_call.1} parent=1 // pred_check
      _
    $region27: #{tpu_custom_call.1} parent=1 // pred_check_branch
      %139 = sbr.rel (0) target = $region29
    $region28: #{tpu_custom_call.1} parent=1 // pred_region
      %140 = dma.done [#allocation4], 128
    $region29: #{tpu_custom_call.1} parent=1 // pred_fallthru
      _
    %141 = vsyncpa [#allocation3], 1
    %142 = vsyncpa [#allocation6], 1
    %143 = vsyncpa [#allocation4], 1

</llo_original>
